<compile_context>
chip_gen: v6e
topology: v6e:2x2x1
jax: 0.10.0
libtpu: 0.0.40
codegen_flags: <defaults>
</compile_context>

<pallas_src>
import numpy as np
import jax
import jax.numpy as jnp
from jax.experimental import pallas as pl
from jax.experimental.pallas import tpu as pltpu


def clip_loss_kernel(scale_ref, img_row_ref, txt_row_ref, img_col_ref,
                     txt_col_ref, out_ref, m_img, l_img, m_txt, l_txt):
    # scale_ref:   (1,)     SMEM  exp(logit_scale)
    # img_row_ref: (TM, D)  VMEM  bf16 normalized image rows  [i*TM, (i+1)*TM)
    # txt_row_ref: (TM, D)  VMEM  bf16 normalized text  rows  [i*TM, (i+1)*TM)
    # img_col_ref: (TN, D)  VMEM  bf16 normalized image rows  [j*TN, (j+1)*TN)
    # txt_col_ref: (TN, D)  VMEM  bf16 normalized text  rows  [j*TN, (j+1)*TN)
    # out_ref:     (TM, 1)  VMEM  per-row (lse_img - diag) + (lse_txt - diag)
    # m_*, l_*:    (TM, 1)  VMEM  online-softmax running max / denominator
    j = pl.program_id(1)

    @pl.when(j == 0)
    def _():
        m_img[...] = jnp.full_like(m_img, -jnp.inf)
        l_img[...] = jnp.zeros_like(l_img)
        m_txt[...] = jnp.full_like(m_txt, -jnp.inf)
        l_txt[...] = jnp.zeros_like(l_txt)

    scale = scale_ref[0]
    dn = (((1,), (1,)), ((), ()))  # contract the feature dim of both operands
    # (TM, TN) logit tiles: bf16 operands on the MXU, f32 accumulation/output.
    s_img = scale * jax.lax.dot_general(
        img_row_ref[...], txt_col_ref[...], dn,
        preferred_element_type=jnp.float32)
    s_txt = scale * jax.lax.dot_general(
        txt_row_ref[...], img_col_ref[...], dn,
        preferred_element_type=jnp.float32)

    def online_lse_update(s, m_ref, l_ref):
        m_new = jnp.maximum(m_ref[...], jnp.max(s, axis=1, keepdims=True))
        l_ref[...] = (l_ref[...] * jnp.exp(m_ref[...] - m_new)
                      + jnp.sum(jnp.exp(s - m_new), axis=1, keepdims=True))
        m_ref[...] = m_new

    online_lse_update(s_img, m_img, l_img)
    online_lse_update(s_txt, m_txt, l_txt)

    @pl.when(j == pl.num_programs(1) - 1)
    def _():
        # Diagonal (label) logit: diag[r] = scale * <img_n[r], txt_n[r]>,
        # shared by both cross-entropy directions (labels are arange(B)).
        diag = scale * jnp.sum(
            img_row_ref[...].astype(jnp.float32)
            * txt_row_ref[...].astype(jnp.float32),
            axis=1, keepdims=True)
        lse_img = m_img[...] + jnp.log(l_img[...])
        lse_txt = m_txt[...] + jnp.log(l_txt[...])
        out_ref[...] = (lse_img - diag) + (lse_txt - diag)


def _pick_block(B, preferred):
    """Largest multiple-of-8 divisor of B that is <= preferred (else B)."""
    if B <= preferred:
        return B
    for blk in range(preferred - preferred % 8, 7, -8):
        if B % blk == 0:
            return blk
    # TODO(synk): pad B to a multiple of 8/128 and mask instead of falling back.
    return B


def clip_loss(image_features, text_features, logit_scale_param,
              max_rows_per_block=256, max_cols_per_block=256):
    """image_features, text_features: (B, 1, D). Returns scalar loss (f32)."""
    img = jnp.squeeze(image_features, axis=1).astype(jnp.float32)
    txt = jnp.squeeze(text_features, axis=1).astype(jnp.float32)
    B, D = img.shape

    # Normalize ONCE here (f32 rsqrt), then cast to bf16 for the MXU.
    img_n = (img * jax.lax.rsqrt(jnp.sum(img * img, axis=1, keepdims=True))
             ).astype(jnp.bfloat16)
    txt_n = (txt * jax.lax.rsqrt(jnp.sum(txt * txt, axis=1, keepdims=True))
             ).astype(jnp.bfloat16)
    scale = jnp.reshape(jnp.exp(logit_scale_param).astype(jnp.float32), (1,))

    # 256 keeps v6e/v7x (256x256 MXU) tiles aligned; also a multiple of 128
    # for v5e.  Falls back to smaller divisors / B itself at small batch.
    tm = _pick_block(B, max_rows_per_block)
    tn = _pick_block(B, max_cols_per_block)
    grid = (B // tm, B // tn)

    per_row = pl.pallas_call(
        clip_loss_kernel,
        out_shape=jax.ShapeDtypeStruct((B, 1), jnp.float32),
        grid_spec=pltpu.PrefetchScalarGridSpec(
            num_scalar_prefetch=0,
            grid=grid,
            in_specs=[
                pl.BlockSpec(memory_space=pltpu.SMEM),        # exp(logit_scale)
                pl.BlockSpec((tm, D), lambda i, j: (i, 0)),   # image row block
                pl.BlockSpec((tm, D), lambda i, j: (i, 0)),   # text  row block
                pl.BlockSpec((tn, D), lambda i, j: (j, 0)),   # image col block
                pl.BlockSpec((tn, D), lambda i, j: (j, 0)),   # text  col block
            ],
            out_specs=pl.BlockSpec((tm, 1), lambda i, j: (i, 0)),
            scratch_shapes=[pltpu.VMEM((tm, 1), jnp.float32)] * 4,
        ),
        compiler_params=pltpu.CompilerParams(
            # Row blocks are independent (v7x megacore-friendly); the column
            # axis carries the online-LSE state and must stay sequential.
            dimension_semantics=("parallel", "arbitrary"),
            vmem_limit_bytes=48 * 1024 * 1024,
        ),
    )(scale, img_n, txt_n, img_n, txt_n)

    # total = (CE_img + CE_txt) / 2 = sum over per-row terms of both / (2B)
    return jnp.sum(per_row) / (2.0 * B)


def clip_loss_ref(image_features, text_features, logit_scale_param):
    """Pure-JAX reference mirroring the PyTorch forward."""
    img = jnp.squeeze(image_features, axis=1)
    txt = jnp.squeeze(text_features, axis=1)
    scale = jnp.exp(logit_scale_param)
    img = img / jnp.linalg.norm(img, axis=1, keepdims=True)
    txt = txt / jnp.linalg.norm(txt, axis=1, keepdims=True)
    logits_per_image = scale * img @ txt.T
    logits_per_text = logits_per_image.T
    labels = jnp.arange(img.shape[0])

    def ce(logits):
        logp = jax.nn.log_softmax(logits, axis=-1)
        return -jnp.mean(logp[jnp.arange(logits.shape[0]), labels])

    return 0.5 * (ce(logits_per_image) + ce(logits_per_text))


if __name__ == "__main__":
    key = jax.random.PRNGKey(0)
    k1, k2, k3, k4 = jax.random.split(key, 4)

    # Small shapes matching the module's forward: (B, 1, D) before .squeeze(1)
    B, D = 8, 32
    image_features = jax.random.normal(k1, (B, 1, D), dtype=jnp.float32)
    text_features = jax.random.normal(k2, (B, 1, D), dtype=jnp.float32)
    # Deterministic parameter init, as in __init__: log(1 / 0.07)
    logit_scale_param = jnp.asarray(np.log(1.0 / 0.07), dtype=jnp.float32)

    loss = jax.block_until_ready(
        clip_loss(image_features, text_features, logit_scale_param))
    ref = clip_loss_ref(image_features, text_features, logit_scale_param)
    # bf16 MXU operands -> looser tolerance than a pure-f32 pipeline.
    assert jnp.allclose(loss, ref, rtol=5e-2, atol=5e-2), (loss, ref)

    # Exercise the multi-step (2x2 grid, online-LSE accumulation) path as well.
    B2, D2 = 16, 128
    img2 = jax.random.normal(k3, (B2, 1, D2), dtype=jnp.float32)
    txt2 = jax.random.normal(k4, (B2, 1, D2), dtype=jnp.float32)
    loss2 = jax.block_until_ready(
        clip_loss(img2, txt2, logit_scale_param,
                  max_rows_per_block=8, max_cols_per_block=8))
    ref2 = clip_loss_ref(img2, txt2, logit_scale_param)
    assert jnp.allclose(loss2, ref2, rtol=5e-2, atol=5e-2), (loss2, ref2)

    print("KERNEL_OK")
</pallas_src>

<mosaic_0001>
module attributes {stable_mosaic.version = 11 : i64} {
  func.func @clip_loss_kernel(%arg0: i32, %arg1: i32, %arg2: memref<1xf32, #tpu.memory_space<smem>>, %arg3: memref<8x32xbf16, #tpu.memory_space<vmem>>, %arg4: memref<8x32xbf16, #tpu.memory_space<vmem>>, %arg5: memref<8x32xbf16, #tpu.memory_space<vmem>>, %arg6: memref<8x32xbf16, #tpu.memory_space<vmem>>, %arg7: memref<8x1xf32, #tpu.memory_space<vmem>>, %arg8: memref<8x1xf32, #tpu.memory_space<vmem>>, %arg9: memref<8x1xf32, #tpu.memory_space<vmem>>, %arg10: memref<8x1xf32, #tpu.memory_space<vmem>>, %arg11: memref<8x1xf32, #tpu.memory_space<vmem>>) attributes {dimension_semantics = [#tpu.dimension_semantics<parallel>, #tpu.dimension_semantics<arbitrary>], iteration_bounds = array<i64: 1, 1>, scalar_prefetch = 0 : i64, scratch_operands = 4 : i64, tpu.core_type = #tpu.core_type<tc>, window_params = [{transform_indices = @transform_0, window_bounds = array<i64: 1>}, {transform_indices = @transform_1, window_bounds = array<i64: 8, 32>}, {transform_indices = @transform_2, window_bounds = array<i64: 8, 32>}, {transform_indices = @transform_3, window_bounds = array<i64: 8, 32>}, {transform_indices = @transform_4, window_bounds = array<i64: 8, 32>}, {transform_indices = @transform_5, window_bounds = array<i64: 8, 1>}]} {
    %c0_i32 = arith.constant 0 : i32
    %0 = arith.cmpi eq, %arg1, %c0_i32 : i32
    %1 = arith.extui %0 : i1 to i32
    %c0_i32_0 = arith.constant 0 : i32
    %2 = arith.cmpi ne, %1, %c0_i32_0 : i32
    scf.if %2 {
      %cst_36 = arith.constant 0xFF800000 : f32
      %51 = vector.broadcast %cst_36 : f32 to vector<8x1xf32>
      %c0_37 = arith.constant 0 : index
      %c0_38 = arith.constant 0 : index
      %52 = vector.load %arg8[%c0_37, %c0_38] : memref<8x1xf32, #tpu.memory_space<vmem>>, vector<8x1xf32>
      tpu.vector_store %arg8[%c0_37, %c0_38], %51 {strides = array<i32>} : memref<8x1xf32, #tpu.memory_space<vmem>>, vector<8x1xf32>,
      %cst_39 = arith.constant 0.000000e+00 : f32
      %53 = vector.broadcast %cst_39 : f32 to vector<8x1xf32>
      %c0_40 = arith.constant 0 : index
      %c0_41 = arith.constant 0 : index
      %54 = vector.load %arg9[%c0_40, %c0_41] : memref<8x1xf32, #tpu.memory_space<vmem>>, vector<8x1xf32>
      tpu.vector_store %arg9[%c0_40, %c0_41], %53 {strides = array<i32>} : memref<8x1xf32, #tpu.memory_space<vmem>>, vector<8x1xf32>,
      %cst_42 = arith.constant 0xFF800000 : f32
      %55 = vector.broadcast %cst_42 : f32 to vector<8x1xf32>
      %c0_43 = arith.constant 0 : index
      %c0_44 = arith.constant 0 : index
      %56 = vector.load %arg10[%c0_43, %c0_44] : memref<8x1xf32, #tpu.memory_space<vmem>>, vector<8x1xf32>
      tpu.vector_store %arg10[%c0_43, %c0_44], %55 {strides = array<i32>} : memref<8x1xf32, #tpu.memory_space<vmem>>, vector<8x1xf32>,
      %cst_45 = arith.constant 0.000000e+00 : f32
      %57 = vector.broadcast %cst_45 : f32 to vector<8x1xf32>
      %c0_46 = arith.constant 0 : index
      %c0_47 = arith.constant 0 : index
      %58 = vector.load %arg11[%c0_46, %c0_47] : memref<8x1xf32, #tpu.memory_space<vmem>>, vector<8x1xf32>
      tpu.vector_store %arg11[%c0_46, %c0_47], %57 {strides = array<i32>} : memref<8x1xf32, #tpu.memory_space<vmem>>, vector<8x1xf32>,
    } else {
    }
    %c0 = arith.constant 0 : index
    %3 = memref.load %arg2[%c0] : memref<1xf32, #tpu.memory_space<smem>>
    %c0_1 = arith.constant 0 : index
    %c0_2 = arith.constant 0 : index
    %4 = vector.load %arg3[%c0_1, %c0_2] : memref<8x32xbf16, #tpu.memory_space<vmem>>, vector<8x32xbf16>
    %c0_3 = arith.constant 0 : index
    %c0_4 = arith.constant 0 : index
    %5 = vector.load %arg6[%c0_3, %c0_4] : memref<8x32xbf16, #tpu.memory_space<vmem>>, vector<8x32xbf16>
    %cst = arith.constant dense<0.000000e+00> : vector<8x8xf32>
    %6 = tpu.matmul %4, %5, %cst {dimension_numbers = #tpu.dot_dimension_numbers<[1], [1], [0], [0], [0, 0, 1, 0], [], []>} : vector<8x32xbf16>, vector<8x32xbf16>, vector<8x8xf32> -> vector<8x8xf32>
    %7 = vector.broadcast %3 : f32 to vector<8x8xf32>
    %8 = arith.mulf %7, %6 : vector<8x8xf32>
    %c0_5 = arith.constant 0 : index
    %c0_6 = arith.constant 0 : index
    %9 = vector.load %arg4[%c0_5, %c0_6] : memref<8x32xbf16, #tpu.memory_space<vmem>>, vector<8x32xbf16>
    %c0_7 = arith.constant 0 : index
    %c0_8 = arith.constant 0 : index
    %10 = vector.load %arg5[%c0_7, %c0_8] : memref<8x32xbf16, #tpu.memory_space<vmem>>, vector<8x32xbf16>
    %cst_9 = arith.constant dense<0.000000e+00> : vector<8x8xf32>
    %11 = tpu.matmul %9, %10, %cst_9 {dimension_numbers = #tpu.dot_dimension_numbers<[1], [1], [0], [0], [0, 0, 1, 0], [], []>} : vector<8x32xbf16>, vector<8x32xbf16>, vector<8x8xf32> -> vector<8x8xf32>
    %12 = vector.broadcast %3 : f32 to vector<8x8xf32>
    %13 = arith.mulf %12, %11 : vector<8x8xf32>
    %c0_10 = arith.constant 0 : index
    %c0_11 = arith.constant 0 : index
    %14 = vector.load %arg8[%c0_10, %c0_11] : memref<8x1xf32, #tpu.memory_space<vmem>>, vector<8x1xf32>
    %cst_12 = arith.constant dense<0xFF800000> : vector<8xf32>
    %15 = vector.multi_reduction <maximumf>, %8, %cst_12 [1] : vector<8x8xf32> to vector<8xf32>
    %16 = vector.shape_cast %15 : vector<8xf32> to vector<8x1xf32>
    %17 = arith.maximumf %14, %16 : vector<8x1xf32>
    %c0_13 = arith.constant 0 : index
    %c0_14 = arith.constant 0 : index
    %18 = vector.load %arg9[%c0_13, %c0_14] : memref<8x1xf32, #tpu.memory_space<vmem>>, vector<8x1xf32>
    %c0_15 = arith.constant 0 : index
    %c0_16 = arith.constant 0 : index
    %19 = vector.load %arg8[%c0_15, %c0_16] : memref<8x1xf32, #tpu.memory_space<vmem>>, vector<8x1xf32>
    %20 = arith.subf %19, %17 : vector<8x1xf32>
    %21 = math.exp %20 : vector<8x1xf32>
    %22 = arith.mulf %18, %21 : vector<8x1xf32>
    %23 = vector.broadcast %17 : vector<8x1xf32> to vector<8x8xf32>
    %24 = arith.subf %8, %23 : vector<8x8xf32>
    %25 = math.exp %24 : vector<8x8xf32>
    %cst_17 = arith.constant dense<0.000000e+00> : vector<8xf32>
    %26 = vector.multi_reduction <add>, %25, %cst_17 [1] : vector<8x8xf32> to vector<8xf32>
    %27 = vector.shape_cast %26 : vector<8xf32> to vector<8x1xf32>
    %28 = arith.addf %22, %27 : vector<8x1xf32>
    %c0_18 = arith.constant 0 : index
    %c0_19 = arith.constant 0 : index
    %29 = vector.load %arg9[%c0_18, %c0_19] : memref<8x1xf32, #tpu.memory_space<vmem>>, vector<8x1xf32>
    tpu.vector_store %arg9[%c0_18, %c0_19], %28 {strides = array<i32>} : memref<8x1xf32, #tpu.memory_space<vmem>>, vector<8x1xf32>,
    %c0_20 = arith.constant 0 : index
    %c0_21 = arith.constant 0 : index
    %30 = vector.load %arg8[%c0_20, %c0_21] : memref<8x1xf32, #tpu.memory_space<vmem>>, vector<8x1xf32>
    tpu.vector_store %arg8[%c0_20, %c0_21], %17 {strides = array<i32>} : memref<8x1xf32, #tpu.memory_space<vmem>>, vector<8x1xf32>,
    %c0_22 = arith.constant 0 : index
    %c0_23 = arith.constant 0 : index
    %31 = vector.load %arg10[%c0_22, %c0_23] : memref<8x1xf32, #tpu.memory_space<vmem>>, vector<8x1xf32>
    %cst_24 = arith.constant dense<0xFF800000> : vector<8xf32>
    %32 = vector.multi_reduction <maximumf>, %13, %cst_24 [1] : vector<8x8xf32> to vector<8xf32>
    %33 = vector.shape_cast %32 : vector<8xf32> to vector<8x1xf32>
    %34 = arith.maximumf %31, %33 : vector<8x1xf32>
    %c0_25 = arith.constant 0 : index
    %c0_26 = arith.constant 0 : index
    %35 = vector.load %arg11[%c0_25, %c0_26] : memref<8x1xf32, #tpu.memory_space<vmem>>, vector<8x1xf32>
    %c0_27 = arith.constant 0 : index
    %c0_28 = arith.constant 0 : index
    %36 = vector.load %arg10[%c0_27, %c0_28] : memref<8x1xf32, #tpu.memory_space<vmem>>, vector<8x1xf32>
    %37 = arith.subf %36, %34 : vector<8x1xf32>
    %38 = math.exp %37 : vector<8x1xf32>
    %39 = arith.mulf %35, %38 : vector<8x1xf32>
    %40 = vector.broadcast %34 : vector<8x1xf32> to vector<8x8xf32>
    %41 = arith.subf %13, %40 : vector<8x8xf32>
    %42 = math.exp %41 : vector<8x8xf32>
    %cst_29 = arith.constant dense<0.000000e+00> : vector<8xf32>
    %43 = vector.multi_reduction <add>, %42, %cst_29 [1] : vector<8x8xf32> to vector<8xf32>
    %44 = vector.shape_cast %43 : vector<8xf32> to vector<8x1xf32>
    %45 = arith.addf %39, %44 : vector<8x1xf32>
    %c0_30 = arith.constant 0 : index
    %c0_31 = arith.constant 0 : index
    %46 = vector.load %arg11[%c0_30, %c0_31] : memref<8x1xf32, #tpu.memory_space<vmem>>, vector<8x1xf32>
    tpu.vector_store %arg11[%c0_30, %c0_31], %45 {strides = array<i32>} : memref<8x1xf32, #tpu.memory_space<vmem>>, vector<8x1xf32>,
    %c0_32 = arith.constant 0 : index
    %c0_33 = arith.constant 0 : index
    %47 = vector.load %arg10[%c0_32, %c0_33] : memref<8x1xf32, #tpu.memory_space<vmem>>, vector<8x1xf32>
    tpu.vector_store %arg10[%c0_32, %c0_33], %34 {strides = array<i32>} : memref<8x1xf32, #tpu.memory_space<vmem>>, vector<8x1xf32>,
    %c0_i32_34 = arith.constant 0 : i32
    %48 = arith.cmpi eq, %arg1, %c0_i32_34 : i32
    %49 = arith.extui %48 : i1 to i32
    %c0_i32_35 = arith.constant 0 : i32
    %50 = arith.cmpi ne, %49, %c0_i32_35 : i32
    scf.if %50 {
      %c0_36 = arith.constant 0 : index
      %c0_37 = arith.constant 0 : index
      %51 = vector.load %arg3[%c0_36, %c0_37] : memref<8x32xbf16, #tpu.memory_space<vmem>>, vector<8x32xbf16>
      %52 = arith.extf %51 : vector<8x32xbf16> to vector<8x32xf32>
      %c0_38 = arith.constant 0 : index
      %c0_39 = arith.constant 0 : index
      %53 = vector.load %arg4[%c0_38, %c0_39] : memref<8x32xbf16, #tpu.memory_space<vmem>>, vector<8x32xbf16>
      %54 = arith.extf %53 : vector<8x32xbf16> to vector<8x32xf32>
      %55 = arith.mulf %52, %54 : vector<8x32xf32>
      %cst_40 = arith.constant dense<0.000000e+00> : vector<8xf32>
      %56 = vector.multi_reduction <add>, %55, %cst_40 [1] : vector<8x32xf32> to vector<8xf32>
      %57 = vector.shape_cast %56 : vector<8xf32> to vector<8x1xf32>
      %58 = vector.broadcast %3 : f32 to vector<8x1xf32>
      %59 = arith.mulf %58, %57 : vector<8x1xf32>
      %c0_41 = arith.constant 0 : index
      %c0_42 = arith.constant 0 : index
      %60 = vector.load %arg8[%c0_41, %c0_42] : memref<8x1xf32, #tpu.memory_space<vmem>>, vector<8x1xf32>
      %c0_43 = arith.constant 0 : index
      %c0_44 = arith.constant 0 : index
      %61 = vector.load %arg9[%c0_43, %c0_44] : memref<8x1xf32, #tpu.memory_space<vmem>>, vector<8x1xf32>
      %62 = math.log %61 : vector<8x1xf32>
      %63 = arith.addf %60, %62 : vector<8x1xf32>
      %c0_45 = arith.constant 0 : index
      %c0_46 = arith.constant 0 : index
      %64 = vector.load %arg10[%c0_45, %c0_46] : memref<8x1xf32, #tpu.memory_space<vmem>>, vector<8x1xf32>
      %c0_47 = arith.constant 0 : index
      %c0_48 = arith.constant 0 : index
      %65 = vector.load %arg11[%c0_47, %c0_48] : memref<8x1xf32, #tpu.memory_space<vmem>>, vector<8x1xf32>
      %66 = math.log %65 : vector<8x1xf32>
      %67 = arith.addf %64, %66 : vector<8x1xf32>
      %68 = arith.subf %63, %59 : vector<8x1xf32>
      %69 = arith.subf %67, %59 : vector<8x1xf32>
      %70 = arith.addf %68, %69 : vector<8x1xf32>
      %c0_49 = arith.constant 0 : index
      %c0_50 = arith.constant 0 : index
      %71 = vector.load %arg7[%c0_49, %c0_50] : memref<8x1xf32, #tpu.memory_space<vmem>>, vector<8x1xf32>
      tpu.vector_store %arg7[%c0_49, %c0_50], %70 {strides = array<i32>} : memref<8x1xf32, #tpu.memory_space<vmem>>, vector<8x1xf32>,
    } else {
    }
    return
  }
  func.func @transform_0(%arg0: i32, %arg1: i32) -> i32 {
    %c0_i32 = arith.constant 0 : i32
    %c0_i32_0 = arith.constant 0 : i32
    return %c0_i32 : i32
  }
  func.func @transform_1(%arg0: i32, %arg1: i32) -> (i32, i32) {
    %c0_i32 = arith.constant 0 : i32
    %c0_i32_0 = arith.constant 0 : i32
    return %arg0, %c0_i32 : i32, i32
  }
  func.func @transform_2(%arg0: i32, %arg1: i32) -> (i32, i32) {
    %c0_i32 = arith.constant 0 : i32
    %c0_i32_0 = arith.constant 0 : i32
    return %arg0, %c0_i32 : i32, i32
  }
  func.func @transform_3(%arg0: i32, %arg1: i32) -> (i32, i32) {
    %c0_i32 = arith.constant 0 : i32
    %c0_i32_0 = arith.constant 0 : i32
    return %arg1, %c0_i32 : i32, i32
  }
  func.func @transform_4(%arg0: i32, %arg1: i32) -> (i32, i32) {
    %c0_i32 = arith.constant 0 : i32
    %c0_i32_0 = arith.constant 0 : i32
    return %arg1, %c0_i32 : i32, i32
  }
  func.func @transform_5(%arg0: i32, %arg1: i32) -> (i32, i32) {
    %c0_i32 = arith.constant 0 : i32
    %c0_i32_0 = arith.constant 0 : i32
    return %arg0, %c0_i32 : i32, i32
  }
}

</mosaic_0001>

<llo_original>
// kernel: tpu_custom_call.1
$region0: #{tpu_custom_call.1}
  #allocation0 [shape = 'u32[]', space=smem, size = 0x4, offset = 0x4, fixed_abs, tag = 'smem constant byte address 0x4 - core index']
  #allocation1 [shape = 'u32[144,128]{1,0:T(1,128)}', space=vmem, size = 0x12000, scoped, tag = 'internal scratch']
  #allocation2 [shape = 'f32[8,1]{1,0:T(8,128)}', space=vmem, size = 0x1000, scoped, tag = 'scratch operand']
  #allocation3 [shape = 'f32[8,1]{1,0:T(8,128)}', space=vmem, size = 0x1000, scoped, tag = 'scratch operand']
  #allocation4 [shape = 'f32[8,1]{1,0:T(8,128)}', space=vmem, size = 0x1000, scoped, tag = 'scratch operand']
  #allocation5 [shape = 'f32[8,1]{1,0:T(8,128)}', space=vmem, size = 0x1000, scoped, tag = 'scratch operand']
  #allocation6 [shape = 'f32[1]{0:T(128)S(6)}', space=smem, size = 0x200, scoped, tag = 'scoped memory for tpu_custom_call.1']
  %s0 = inlined_call_operand.<no memory space> [shape: f32[1], index: 0, kind: input, shape index: {}]
  %s1 = inlined_call_operand.hbm [shape: bf16[8,32], index: 1, kind: input, shape index: {}]
  %s2 = inlined_call_operand.hbm [shape: bf16[8,32], index: 2, kind: input, shape index: {}]
  %s3 = inlined_call_operand.vmem [shape: bf16[8,32], index: 3, kind: input, shape index: {}]
  %s4 = inlined_call_operand.hbm [shape: bf16[8,32], index: 4, kind: input, shape index: {}]
  %s5 = inlined_call_operand.vmem [shape: f32[8,1], index: 5, kind: output, shape index: {}]
  %s6 = sld [smem:[#allocation0]]
  $region50: #{tpu_custom_call.1} parent=0
    _
  %s8 = ssub.s32 1, %s6
  %s9 = scalar_select 0, %s8, %s6
  %10 = sst [smem:[#allocation6]] %s0
  $region1: #{tpu_custom_call.1} parent=0
    #allocation7 [shape = 'u8[2048]{0}', space=vmem, size = 0x800, scoped, tag = 'input window, operand 1, single buffered']
    #allocation8 [shape = 's32[1]{0}', space=sflag, size = 0x4, scoped, tag = 'scoped memory for tpu_custom_call.1']
    #allocation9 [shape = 'u8[2048]{0}', space=vmem, size = 0x800, scoped, tag = 'input window, operand 2, single buffered']
    #allocation10 [shape = 's32[1]{0}', space=sflag, size = 0x4, scoped, tag = 'scoped memory for tpu_custom_call.1']
    #allocation11 [shape = 'u8[2048]{0}', space=vmem, size = 0x800, scoped, tag = 'input window, operand 4, single buffered']
    %11 = vsyncpa [#allocation8], 0
    %12 = vsyncpa [#allocation10], 0
    // Predicated region
    $region2: #{tpu_custom_call.1} parent=1 // pred_check
      _
    $region3: #{tpu_custom_call.1} parent=1 // pred_check_branch
      %14 = sbr.rel (0) target = $region5
    $region4: #{tpu_custom_call.1} parent=1 // pred_region
      _
    $region5: #{tpu_custom_call.1} parent=1 // pred_fallthru
      _
    // Predicated region
    $region6: #{tpu_custom_call.1} parent=1 // pred_check
      _
    $region7: #{tpu_custom_call.1} parent=1 // pred_check_branch
      %16 = sbr.rel (0) target = $region9
    $region8: #{tpu_custom_call.1} parent=1 // pred_region
      %s18 = ssub.s32 64, 64
      %19 = vsyncadd [#allocation8], %s18
      %s21 = sshll.u32 [#allocation7], 4
      %s22 = int_to_ptr.vmem [resolvable:$true] %s21
      %24 = dma.hbm_to_vmem [thread:$0]  %s1, 64, %s22, [#allocation8]
    $region9: #{tpu_custom_call.1} parent=1 // pred_fallthru
      _
    // Predicated region
    $region10: #{tpu_custom_call.1} parent=1 // pred_check
      _
    $region11: #{tpu_custom_call.1} parent=1 // pred_check_branch
      %26 = sbr.rel (0) target = $region13
    $region12: #{tpu_custom_call.1} parent=1 // pred_region
      %s28 = ssub.s32 64, 64
      %29 = vsyncadd [#allocation10], %s28
      %s31 = sshll.u32 [#allocation9], 4
      %s32 = int_to_ptr.vmem [resolvable:$true] %s31
      %34 = dma.hbm_to_vmem [thread:$0]  %s2, 64, %s32, [#allocation10]
    $region13: #{tpu_custom_call.1} parent=1 // pred_fallthru
      _
    // Predicated region
    $region14: #{tpu_custom_call.1} parent=1 // pred_check
      _
    $region15: #{tpu_custom_call.1} parent=1 // pred_check_branch
      %36 = sbr.rel (0) target = $region17
    $region16: #{tpu_custom_call.1} parent=1 // pred_region
      _
    $region17: #{tpu_custom_call.1} parent=1 // pred_fallthru
      _
    // Predicated region
    $region18: #{tpu_custom_call.1} parent=1 // pred_check
      _
    $region19: #{tpu_custom_call.1} parent=1 // pred_check_branch
      %38 = sbr.rel (0) target = $region21
    $region20: #{tpu_custom_call.1} parent=1 // pred_region
      %s40 = ssub.s32 64, 64
      %41 = vsyncadd [#allocation10], %s40
      %s43 = sshll.u32 [#allocation11], 4
      %s44 = int_to_ptr.vmem [resolvable:$true] %s43
      %46 = dma.hbm_to_vmem [thread:$0]  %s4, 64, %s44, [#allocation10]
    $region21: #{tpu_custom_call.1} parent=1 // pred_fallthru
      _
    // Predicated region
    $region22: #{tpu_custom_call.1} parent=1 // pred_check
      _
    $region23: #{tpu_custom_call.1} parent=1 // pred_check_branch
      %48 = sbr.rel (0) target = $region25
    $region24: #{tpu_custom_call.1} parent=1 // pred_region
      %49 = dma.done [#allocation8], 64
    $region25: #{tpu_custom_call.1} parent=1 // pred_fallthru
      _
    // Predicated region
    $region26: #{tpu_custom_call.1} parent=1 // pred_check
      _
    $region27: #{tpu_custom_call.1} parent=1 // pred_check_branch
      %51 = sbr.rel (0) target = $region29
    $region28: #{tpu_custom_call.1} parent=1 // pred_region
      %52 = dma.done [#allocation10], 64
    $region29: #{tpu_custom_call.1} parent=1 // pred_fallthru
      _
    // Predicated region
    $region30: #{tpu_custom_call.1} parent=1 // pred_check
      _
    $region31: #{tpu_custom_call.1} parent=1 // pred_check_branch
      %54 = sbr.rel (0) target = $region33
    $region32: #{tpu_custom_call.1} parent=1 // pred_region
      %55 = dma.done [#allocation10], 64
    $region33: #{tpu_custom_call.1} parent=1 // pred_fallthru
      _
    %p57 = scmp.eq.s32.totalorder 0, 0
    // Predicated region
    $region34: #{tpu_custom_call.1} parent=1 // pred_check
      %p58 = pneg %p57
    $region35: #{tpu_custom_call.1} parent=1 // pred_check_branch
      %60 = sbr.rel (%p58) target = $region37
    $region36: #{tpu_custom_call.1} parent=1 // pred_region
      %vm61 = vcmask 7168
      %62 = vst.msk [vmem:[#allocation2] sm:$0xff] %vm61, -inf
      %63 = vst.msk [vmem:[#allocation3] sm:$0xff] %vm61, 0.0
      %64 = vst.msk [vmem:[#allocation4] sm:$0xff] %vm61, -inf
      %65 = vst.msk [vmem:[#allocation5] sm:$0xff] %vm61, 0.0
    $region37: #{tpu_custom_call.1} parent=1 // pred_fallthru
      _
    %s66 = sld [smem:[#allocation6]]
    %v67 = vld [vmem:[#allocation7] sm:$0xf]
    %v68 = vld [vmem:[#allocation11] sm:$0xf]
    %vm69 = vcmask 261120
    %v71 = vsel %vm69, %v67, 0
    %v74 = vsel %vm69, %v68, 0
    %76 = vmatprep.subr.bf16.mxu0 0
    %77 = vmatpush1.bf16.xpose.msra.mxu0 0
    %78 = vmatprep.subr.bf16.mxu0 0
    %79 = vmatpush1.bf16.xpose.msra.mxu0 0
    %80 = vmatprep.subr.bf16.mxu0 0
    %81 = vmatpush1.bf16.xpose.msra.mxu0 0
    %82 = vmatprep.subr.bf16.mxu0 0
    %83 = vmatpush1.bf16.xpose.msra.mxu0 0
    %84 = vmatprep.subr.bf16.mxu0 0
    %85 = vmatpush1.bf16.xpose.msra.mxu0 0
    %86 = vmatprep.subr.bf16.mxu0 0
    %87 = vmatpush1.bf16.xpose.msra.mxu0 0
    %88 = vmatprep.subr.bf16.mxu0 0
    %89 = vmatpush1.bf16.xpose.msra.mxu0 0
    %90 = vmatprep.subr.bf16.mxu0 0
    %91 = vmatpush1.bf16.xpose.msra.mxu0 %v74
    %92 = vmatprep.subr.bf16.mxu0 0
    %93 = vmatpush2.bf16.xpose.msra.mxu0 0
    %94 = vmatprep.subr.bf16.mxu0 0
    %95 = vmatpush2.bf16.xpose.msra.mxu0 0
    %96 = vmatprep.subr.bf16.mxu0 0
    %97 = vmatpush2.bf16.xpose.msra.mxu0 0
    %98 = vmatprep.subr.bf16.mxu0 0
    %99 = vmatpush2.bf16.xpose.msra.mxu0 0
    %100 = vmatprep.subr.bf16.mxu0 0
    %101 = vmatpush2.bf16.xpose.msra.mxu0 0
    %102 = vmatprep.subr.bf16.mxu0 0
    %103 = vmatpush2.bf16.xpose.msra.mxu0 0
    %104 = vmatprep.subr.bf16.mxu0 0
    %105 = vmatpush2.bf16.xpose.msra.mxu0 0
    %106 = vmatprep.subr.bf16.mxu0 0
    %107 = vmatpush2.bf16.xpose.msra.mxu0 0
    %108 = vmatprep.mubr.bf16.mxu0 0
    %109 = vmatmul.mubr.bf16.gmra.mxu0 %v71
    %v110 = vpop.f32.mrf.mxu0
    %v111 = vadd.f32 0.0, %v110
    %v112 = vpop.f32.mrf.mxu0
    %v113 = vpop.f32.mrf.mxu0
    %v114 = vpop.f32.mrf.mxu0
    %115 = vdwg.mxu0
    %v116 = vstv %s66
    %v117 = vmul.f32 %v116, %v111
    %v118 = vld [vmem:[#allocation9] sm:$0xf]
    %v119 = vld [vmem:[%s3] sm:$0xf]
    %v121 = vsel %vm69, %v118, 0
    %v124 = vsel %vm69, %v119, 0
    %126 = vmatprep.subr.bf16.mxu0 0
    %127 = vmatpush1.bf16.xpose.msra.mxu0 0
    %128 = vmatprep.subr.bf16.mxu0 0
    %129 = vmatpush1.bf16.xpose.msra.mxu0 0
    %130 = vmatprep.subr.bf16.mxu0 0
    %131 = vmatpush1.bf16.xpose.msra.mxu0 0
    %132 = vmatprep.subr.bf16.mxu0 0
    %133 = vmatpush1.bf16.xpose.msra.mxu0 0
    %134 = vmatprep.subr.bf16.mxu0 0
    %135 = vmatpush1.bf16.xpose.msra.mxu0 0
    %136 = vmatprep.subr.bf16.mxu0 0
    %137 = vmatpush1.bf16.xpose.msra.mxu0 0
    %138 = vmatprep.subr.bf16.mxu0 0
    %139 = vmatpush1.bf16.xpose.msra.mxu0 0
    %140 = vmatprep.subr.bf16.mxu0 0
    %141 = vmatpush1.bf16.xpose.msra.mxu0 %v124
    %142 = vmatprep.subr.bf16.mxu0 0
    %143 = vmatpush2.bf16.xpose.msra.mxu0 0
    %144 = vmatprep.subr.bf16.mxu0 0
    %145 = vmatpush2.bf16.xpose.msra.mxu0 0
    %146 = vmatprep.subr.bf16.mxu0 0
    %147 = vmatpush2.bf16.xpose.msra.mxu0 0
    %148 = vmatprep.subr.bf16.mxu0 0
    %149 = vmatpush2.bf16.xpose.msra.mxu0 0
    %150 = vmatprep.subr.bf16.mxu0 0
    %151 = vmatpush2.bf16.xpose.msra.mxu0 0
    %152 = vmatprep.subr.bf16.mxu0 0
    %153 = vmatpush2.bf16.xpose.msra.mxu0 0
    %154 = vmatprep.subr.bf16.mxu0 0
    %155 = vmatpush2.bf16.xpose.msra.mxu0 0
    %156 = vmatprep.subr.bf16.mxu0 0
    %157 = vmatpush2.bf16.xpose.msra.mxu0 0
    %158 = vmatprep.mubr.bf16.mxu0 0
    %159 = vmatmul.mubr.bf16.gmra.mxu0 %v121
    %v160 = vpop.f32.mrf.mxu0
    %v161 = vadd.f32 0.0, %v160
    %v162 = vpop.f32.mrf.mxu0
    %v163 = vpop.f32.mrf.mxu0
    %v164 = vpop.f32.mrf.mxu0
    %165 = vdwg.mxu0
    %v166 = vmul.f32 %v116, %v161
    %v167 = vld [vmem:[#allocation2] sm:$0xff]
    %vm168 = vcmask 64512
    %v169 = vsel %vm168, %v117, -inf
    %170 = vmax.xlane.f32.xlu0 %v169
    %v171 = vpop.xlane.xlu0 %170
    %v172 = vmax.f32 %v167, %v171
    %v173 = vld [vmem:[#allocation3] sm:$0xff]
    %v174 = vsub.f32 %v167, %v172
    %v175 = vmul.f32 %v174, 1.442695
    %v176 = vpow.pop %v175
    %v177 = vmul.f32 %v173, %v176
    %179 = vset.pattern.permute.xlu0 0
    %180 = vperm.xlu0 %179, %v172
    %v181 = vpop.permute.xlu0 %180
    %v183 = vsub.f32 %v117, %v181
    %v184 = vmul.f32 %v183, 1.442695
    %v185 = vpow.pop %v184
    %v186 = vsel %vm168, %v185, 0.0
    %187 = vadd.xlane.f32.xlu0 %v186
    %v188 = vpop.xlane.xlu0 %187
    %v189 = vadd.f32 %v177, %v188
    %vm190 = vcmask 7168
    %191 = vst.msk [vmem:[#allocation3] sm:$0xff] %vm190, %v189
    %192 = vst.msk [vmem:[#allocation2] sm:$0xff] %vm190, %v172
    %v193 = vld [vmem:[#allocation4] sm:$0xff]
    %v194 = vsel %vm168, %v166, -inf
    %195 = vmax.xlane.f32.xlu0 %v194
    %v196 = vpop.xlane.xlu0 %195
    %v197 = vmax.f32 %v193, %v196
    %v198 = vld [vmem:[#allocation5] sm:$0xff]
    %v199 = vsub.f32 %v193, %v197
    %v200 = vmul.f32 %v199, 1.442695
    %v201 = vpow.pop %v200
    %v202 = vmul.f32 %v198, %v201
    %204 = vset.pattern.permute.xlu0 0
    %205 = vperm.xlu0 %204, %v197
    %v206 = vpop.permute.xlu0 %205
    %v208 = vsub.f32 %v166, %v206
    %v209 = vmul.f32 %v208, 1.442695
    %v210 = vpow.pop %v209
    %v211 = vsel %vm168, %v210, 0.0
    %212 = vadd.xlane.f32.xlu0 %v211
    %v213 = vpop.xlane.xlu0 %212
    %v214 = vadd.f32 %v202, %v213
    %215 = vst.msk [vmem:[#allocation5] sm:$0xff] %vm190, %v214
    %216 = vst.msk [vmem:[#allocation4] sm:$0xff] %vm190, %v197
    // Predicated region
    $region38: #{tpu_custom_call.1} parent=1 // pred_check
      %p217 = pneg %p57
    $region39: #{tpu_custom_call.1} parent=1 // pred_check_branch
      %219 = sbr.rel (%p217) target = $region41
    $region40: #{tpu_custom_call.1} parent=1 // pred_region
      %v220 = vld [vmem:[#allocation7] sm:$0xf]
      %v221 = vunpack.c.l.bf16 %v220
      %v222 = vld [vmem:[#allocation9] sm:$0xf]
      %v223 = vunpack.c.l.bf16 %v222
      %v224 = vmul.f32 %v221, %v223
      %v225 = vsel %vm69, %v224, 0.0
      %226 = vadd.xlane.f32.xlu0 %v225
      %v227 = vpop.xlane.xlu0 %226
      %v228 = vmul.f32 %v116, %v227
      %v229 = vld [vmem:[#allocation2] sm:$0xff]
      %v230 = vld [vmem:[#allocation3] sm:$0xff]
      %v231 = vlog2.pop %v230
      %v232 = vmul.f32 %v231, 0.6931472
      %v233 = vadd.f32 %v229, %v232
      %v234 = vld [vmem:[#allocation4] sm:$0xff]
      %v235 = vld [vmem:[#allocation5] sm:$0xff]
      %v236 = vlog2.pop %v235
      %v237 = vmul.f32 %v236, 0.6931472
      %v238 = vadd.f32 %v234, %v237
      %v239 = vsub.f32 %v233, %v228
      %v240 = vsub.f32 %v238, %v228
      %v241 = vadd.f32 %v239, %v240
      %242 = vst.msk [vmem:[%s5] sm:$0xff] %vm190, %v241
    $region41: #{tpu_custom_call.1} parent=1 // pred_fallthru
      _
    // Predicated region
    $region42: #{tpu_custom_call.1} parent=1 // pred_check
      _
    $region43: #{tpu_custom_call.1} parent=1 // pred_check_branch
      %244 = sbr.rel (0) target = $region45
    $region44: #{tpu_custom_call.1} parent=1 // pred_region
      _
    $region45: #{tpu_custom_call.1} parent=1 // pred_fallthru
      _
    // Predicated region
    $region46: #{tpu_custom_call.1} parent=1 // pred_check
      _
    $region47: #{tpu_custom_call.1} parent=1 // pred_check_branch
      %246 = sbr.rel (0) target = $region49
    $region48: #{tpu_custom_call.1} parent=1 // pred_region
      _
    $region49: #{tpu_custom_call.1} parent=1 // pred_fallthru
      _
    %247 = vsyncpa [#allocation8], 1
    %248 = vsyncpa [#allocation10], 1

</llo_original>
